<compile_context>
chip_gen: v7x
topology: tpu7x:2x2x1
jax: 0.10.0
libtpu: 0.0.40
codegen_flags: <defaults>
</compile_context>

<pallas_src>
import functools

import jax
import jax.numpy as jnp
from jax.experimental import pallas as pl
from jax.experimental.pallas import tpu as pltpu

ALPHA = 0.25
GAMMA = 2.0

LANES = 128
SUBLANES = 8
TILE = SUBLANES * LANES          # one native (sublane, lane) tile = 1024 elems
MAX_BLK8 = 1024                  # block = (1024, 8, 128) f32 = 4 MiB per stream
NUM_CORES = 2                    # partial-sum split for v7x megacore


def _stable_bce_with_logits(x, t):
    # Numerically stable BCE-with-logits (matches PyTorch reduction='none'):
    #   bce = max(x, 0) - x*t + log(1 + exp(-|x|))
    return jnp.maximum(x, 0.0) - x * t + jnp.log1p(jnp.exp(-jnp.abs(x)))


def _focal_modulator(one_minus_pt, gamma):
    if gamma == 2.0:
        return one_minus_pt * one_minus_pt      # avoid EUP float pow
    if gamma == 1.0:
        return one_minus_pt
    if gamma == 0.0:
        return jnp.ones_like(one_minus_pt)
    return one_minus_pt ** gamma


def _focal_loss_kernel(x_ref, t_ref, o_ref, *, alpha, gamma, rows8, blk8,
                       blocks_per_core, need_mask):
    c = pl.program_id(0)          # "parallel" partial-sum axis (megacore)
    k = pl.program_id(1)          # "arbitrary" reduction axis

    # The output block is resident across the whole k axis (its index_map
    # ignores k), so accumulate directly into it — no VMEM scratch needed.
    @pl.when(k == 0)
    def _():
        o_ref[...] = jnp.zeros_like(o_ref)

    x = x_ref[...].astype(jnp.float32)
    t = t_ref[...].astype(jnp.float32)
    bce = _stable_bce_with_logits(x, t)
    pt = jnp.exp(-bce)
    f_loss = (alpha * _focal_modulator(1.0 - pt, gamma)) * bce

    if need_mask:
        blk = c * blocks_per_core + k          # logical (unclamped) block index
        row0 = blk * blk8

        @pl.when(row0 + blk8 <= rows8)
        def _():                               # fully interior: unmasked path
            o_ref[...] += jnp.sum(f_loss, axis=0, keepdims=True)

        @pl.when(row0 + blk8 > rows8)
        def _():                               # boundary / clamped-duplicate
            i0 = jax.lax.broadcasted_iota(jnp.int32, f_loss.shape, 0)
            masked = jnp.where(row0 + i0 < rows8, f_loss, 0.0)
            o_ref[...] += jnp.sum(masked, axis=0, keepdims=True)
    else:
        o_ref[...] += jnp.sum(f_loss, axis=0, keepdims=True)


def _focal_loss_sum_small(x, t, alpha, gamma):
    # Tiny jnp epilogue for the <1024-element ragged tail.
    x = x.astype(jnp.float32)
    t = t.astype(jnp.float32)
    bce = _stable_bce_with_logits(x, t)
    pt = jnp.exp(-bce)
    return jnp.sum((alpha * _focal_modulator(1.0 - pt, gamma)) * bce)


def focal_loss(inputs, targets, alpha=ALPHA, gamma=GAMMA):
    assert inputs.shape == targets.shape
    alpha = float(alpha)
    gamma = float(gamma)
    n_elems = inputs.size

    x_flat = inputs.reshape(-1)
    t_flat = targets.reshape(-1)

    rows8 = n_elems // TILE              # bulk rows handled by the kernel
    n_bulk = rows8 * TILE
    total = jnp.zeros((), jnp.float32)

    if rows8 > 0:
        if n_bulk == n_elems:
            # Aligned: pure (free) reshape, no copies at all.
            x3 = x_flat.reshape(rows8, SUBLANES, LANES)
            t3 = t_flat.reshape(rows8, SUBLANES, LANES)
        else:
            # TODO(synk): a fully copy-free ragged path needs manual DMA on the
            # flat HBM ref; the prefix slice below still avoids the pad of the
            # whole array and the tail is handled with a tiny jnp epilogue.
            x3 = x_flat[:n_bulk].reshape(rows8, SUBLANES, LANES)
            t3 = t_flat[:n_bulk].reshape(rows8, SUBLANES, LANES)

        blk8 = min(MAX_BLK8, rows8)
        total_blocks = -(-rows8 // blk8)

        # Megacore split only when it does not force a wasted clamped-duplicate
        # block, or when that single wasted block is a small fraction of work.
        if total_blocks >= NUM_CORES and (
                total_blocks % NUM_CORES == 0 or total_blocks >= 8):
            num_cores = NUM_CORES
        else:
            num_cores = 1
        blocks_per_core = -(-total_blocks // num_cores)
        covered_rows = num_cores * blocks_per_core * blk8
        need_mask = covered_rows != rows8
        last_block = total_blocks - 1

        def in_map(c, k):
            blk = c * blocks_per_core + k
            # Clamp so the DMA never targets a block fully past the array;
            # clamped (duplicate) blocks contribute zero via the in-kernel mask.
            return (jnp.minimum(blk, last_block), 0, 0)

        in_spec = pl.BlockSpec((blk8, SUBLANES, LANES), in_map)
        out_spec = pl.BlockSpec((1, SUBLANES, LANES), lambda c, k: (c, 0, 0))

        kernel = functools.partial(
            _focal_loss_kernel, alpha=alpha, gamma=gamma, rows8=rows8,
            blk8=blk8, blocks_per_core=blocks_per_core, need_mask=need_mask)

        # VMEM budget: 2 streams x 2 pipeline buffers x block bytes (+ slack).
        block_bytes = blk8 * TILE * 4
        vmem_limit = min(max(4 * block_bytes + (4 << 20), 32 << 20), 48 << 20)

        partials = pl.pallas_call(
            kernel,
            out_shape=jax.ShapeDtypeStruct((num_cores, SUBLANES, LANES),
                                           jnp.float32),
            grid_spec=pltpu.PrefetchScalarGridSpec(
                num_scalar_prefetch=0,
                grid=(num_cores, blocks_per_core),
                in_specs=[in_spec, in_spec],
                out_specs=out_spec,
            ),
            compiler_params=pltpu.CompilerParams(
                dimension_semantics=("parallel", "arbitrary"),
                vmem_limit_bytes=vmem_limit,
            ),
        )(x3, t3)

        total = total + jnp.sum(partials)

    if n_bulk != n_elems:
        total = total + _focal_loss_sum_small(
            x_flat[n_bulk:], t_flat[n_bulk:], alpha, gamma)

    return total / jnp.float32(n_elems)


def _focal_loss_ref(inputs, targets, alpha=ALPHA, gamma=GAMMA):
    x = inputs.astype(jnp.float32)
    t = targets.astype(jnp.float32)
    bce = jnp.maximum(x, 0.0) - x * t + jnp.log1p(jnp.exp(-jnp.abs(x)))
    pt = jnp.exp(-bce)
    return jnp.mean(alpha * (1.0 - pt) ** gamma * bce)


if __name__ == "__main__":
    key = jax.random.PRNGKey(0)
    k1, k2 = jax.random.split(key)

    # Small shapes consistent with a dense-prediction use of FocalLoss.
    shape = (2, 4, 16, 16)  # NCHW logits
    inputs = jax.random.normal(k1, shape, dtype=jnp.float32)
    targets = (jax.random.uniform(k2, shape) > 0.5).astype(jnp.float32)

    loss = focal_loss(inputs, targets)
    jax.block_until_ready(loss)

    ref = _focal_loss_ref(inputs, targets)
    assert jnp.allclose(loss, ref, rtol=1e-5, atol=1e-6), (loss, ref)

    print("KERNEL_OK")
</pallas_src>

<mosaic_0001>
module attributes {stable_mosaic.version = 11 : i64} {
  func.func @_focal_loss_kernel(%arg0: i32, %arg1: i32, %arg2: memref<2x8x128xf32, #tpu.memory_space<vmem>>, %arg3: memref<2x8x128xf32, #tpu.memory_space<vmem>>, %arg4: memref<1x8x128xf32, #tpu.memory_space<vmem>>) attributes {dimension_semantics = [#tpu.dimension_semantics<parallel>, #tpu.dimension_semantics<arbitrary>], iteration_bounds = array<i64: 1, 1>, scalar_prefetch = 0 : i64, scratch_operands = 0 : i64, tpu.core_type = #tpu.core_type<tc>, window_params = [{transform_indices = @transform_0, window_bounds = array<i64: 2, 8, 128>}, {transform_indices = @transform_1, window_bounds = array<i64: 2, 8, 128>}, {transform_indices = @transform_2, window_bounds = array<i64: 1, 8, 128>}]} {
    %c0_i32 = arith.constant 0 : i32
    %0 = arith.cmpi eq, %arg1, %c0_i32 : i32
    %1 = arith.extui %0 : i1 to i32
    %c0_i32_0 = arith.constant 0 : i32
    %2 = arith.cmpi ne, %1, %c0_i32_0 : i32
    scf.if %2 {
      %cst_17 = arith.constant 0.000000e+00 : f32
      %29 = vector.broadcast %cst_17 : f32 to vector<1x8x128xf32>
      %c0_18 = arith.constant 0 : index
      %c0_19 = arith.constant 0 : index
      %c0_20 = arith.constant 0 : index
      %30 = vector.load %arg4[%c0_18, %c0_19, %c0_20] : memref<1x8x128xf32, #tpu.memory_space<vmem>>, vector<1x8x128xf32>
      tpu.vector_store %arg4[%c0_18, %c0_19, %c0_20], %29 {strides = array<i32>} : memref<1x8x128xf32, #tpu.memory_space<vmem>>, vector<1x8x128xf32>,
    } else {
    }
    %c0 = arith.constant 0 : index
    %c0_1 = arith.constant 0 : index
    %c0_2 = arith.constant 0 : index
    %3 = vector.load %arg2[%c0, %c0_1, %c0_2] : memref<2x8x128xf32, #tpu.memory_space<vmem>>, vector<2x8x128xf32>
    %c0_3 = arith.constant 0 : index
    %c0_4 = arith.constant 0 : index
    %c0_5 = arith.constant 0 : index
    %4 = vector.load %arg3[%c0_3, %c0_4, %c0_5] : memref<2x8x128xf32, #tpu.memory_space<vmem>>, vector<2x8x128xf32>
    %cst = arith.constant 0.000000e+00 : f32
    %5 = vector.broadcast %cst : f32 to vector<2x8x128xf32>
    %6 = arith.maximumf %3, %5 : vector<2x8x128xf32>
    %7 = arith.mulf %3, %4 : vector<2x8x128xf32>
    %8 = arith.subf %6, %7 : vector<2x8x128xf32>
    %9 = math.absf %3 : vector<2x8x128xf32>
    %cst_6 = arith.constant 0.000000e+00 : f32
    %10 = vector.broadcast %cst_6 : f32 to vector<2x8x128xf32>
    %11 = arith.subf %10, %9 : vector<2x8x128xf32>
    %12 = math.exp %11 : vector<2x8x128xf32>
    %13 = math.log1p %12 : vector<2x8x128xf32>
    %14 = arith.addf %8, %13 : vector<2x8x128xf32>
    %cst_7 = arith.constant 0.000000e+00 : f32
    %15 = vector.broadcast %cst_7 : f32 to vector<2x8x128xf32>
    %16 = arith.subf %15, %14 : vector<2x8x128xf32>
    %17 = math.exp %16 : vector<2x8x128xf32>
    %cst_8 = arith.constant 1.000000e+00 : f32
    %18 = vector.broadcast %cst_8 : f32 to vector<2x8x128xf32>
    %19 = arith.subf %18, %17 : vector<2x8x128xf32>
    %20 = arith.mulf %19, %19 : vector<2x8x128xf32>
    %cst_9 = arith.constant 2.500000e-01 : f32
    %21 = vector.broadcast %cst_9 : f32 to vector<2x8x128xf32>
    %22 = arith.mulf %21, %20 : vector<2x8x128xf32>
    %23 = arith.mulf %22, %14 : vector<2x8x128xf32>
    %c0_10 = arith.constant 0 : index
    %c0_11 = arith.constant 0 : index
    %c0_12 = arith.constant 0 : index
    %24 = vector.load %arg4[%c0_10, %c0_11, %c0_12] : memref<1x8x128xf32, #tpu.memory_space<vmem>>, vector<1x8x128xf32>
    %cst_13 = arith.constant dense<0.000000e+00> : vector<8x128xf32>
    %25 = vector.multi_reduction <add>, %23, %cst_13 [0] : vector<2x8x128xf32> to vector<8x128xf32>
    %26 = vector.shape_cast %25 : vector<8x128xf32> to vector<1x8x128xf32>
    %27 = arith.addf %24, %26 : vector<1x8x128xf32>
    %c0_14 = arith.constant 0 : index
    %c0_15 = arith.constant 0 : index
    %c0_16 = arith.constant 0 : index
    %28 = vector.load %arg4[%c0_14, %c0_15, %c0_16] : memref<1x8x128xf32, #tpu.memory_space<vmem>>, vector<1x8x128xf32>
    tpu.vector_store %arg4[%c0_14, %c0_15, %c0_16], %27 {strides = array<i32>} : memref<1x8x128xf32, #tpu.memory_space<vmem>>, vector<1x8x128xf32>,
    return
  }
  func.func @transform_0(%arg0: i32, %arg1: i32) -> (i32, i32, i32) {
    %c1_i32 = arith.constant 1 : i32
    %0 = arith.muli %arg0, %c1_i32 : i32
    %1 = arith.addi %0, %arg1 : i32
    %c0_i32 = arith.constant 0 : i32
    %2 = arith.minsi %1, %c0_i32 : i32
    %c0_i32_0 = arith.constant 0 : i32
    %c0_i32_1 = arith.constant 0 : i32
    %c0_i32_2 = arith.constant 0 : i32
    return %2, %c0_i32_0, %c0_i32_1 : i32, i32, i32
  }
  func.func @transform_1(%arg0: i32, %arg1: i32) -> (i32, i32, i32) {
    %c1_i32 = arith.constant 1 : i32
    %0 = arith.muli %arg0, %c1_i32 : i32
    %1 = arith.addi %0, %arg1 : i32
    %c0_i32 = arith.constant 0 : i32
    %2 = arith.minsi %1, %c0_i32 : i32
    %c0_i32_0 = arith.constant 0 : i32
    %c0_i32_1 = arith.constant 0 : i32
    %c0_i32_2 = arith.constant 0 : i32
    return %2, %c0_i32_0, %c0_i32_1 : i32, i32, i32
  }
  func.func @transform_2(%arg0: i32, %arg1: i32) -> (i32, i32, i32) {
    %c0_i32 = arith.constant 0 : i32
    %c0_i32_0 = arith.constant 0 : i32
    %c0_i32_1 = arith.constant 0 : i32
    return %arg0, %c0_i32, %c0_i32_0 : i32, i32, i32
  }
}

</mosaic_0001>

<llo_original>
// kernel: tpu_custom_call.1
$region0: #{tpu_custom_call.1}
  #allocation0 [shape = 'u32[]', space=smem, size = 0x4, offset = 0x4, fixed_abs, tag = 'smem constant byte address 0x4 - core index']
  #allocation1 [shape = 'u32[144,128]{1,0:T(1,128)}', space=vmem, size = 0x12000, scoped, tag = 'internal scratch']
  %s0 = inlined_call_operand.hbm [shape: f32[2,8,128], index: 0, kind: input, shape index: {}]
  %s1 = inlined_call_operand.hbm [shape: f32[2,8,128], index: 1, kind: input, shape index: {}]
  %s2 = inlined_call_operand.hbm [shape: f32[1,8,128], index: 2, kind: output, shape index: {}]
  %s3 = sld [smem:[#allocation0]]
  $region30: #{tpu_custom_call.1} parent=0
    _
  %s5 = ssub.s32 1, %s3
  %s6 = scalar_select 0, %s5, %s3
  $region1: #{tpu_custom_call.1} parent=0
    #allocation2 [shape = 'u8[8192]{0}', space=vmem, size = 0x2000, scoped, tag = 'input window, operand 0, single buffered']
    #allocation3 [shape = 's32[1]{0}', space=sflag, size = 0x4, scoped, tag = 'scoped memory for tpu_custom_call.1']
    #allocation4 [shape = 's32[1]{0}', space=sflag, size = 0x4, scoped, tag = 'scoped memory for tpu_custom_call.1']
    #allocation5 [shape = 'u8[8192]{0}', space=vmem, size = 0x2000, scoped, tag = 'input window, operand 1, single buffered']
    #allocation6 [shape = 's32[1]{0}', space=sflag, size = 0x4, scoped, tag = 'scoped memory for tpu_custom_call.1']
    #allocation7 [shape = 'u8[4096]{0}', space=vmem, size = 0x1000, scoped, tag = 'output window, operand 0, single buffered']
    %7 = vsyncpa [#allocation3], 0
    %8 = vsyncpa [#allocation6], 0
    %9 = vsyncpa [#allocation4], 0
    // Predicated region
    $region2: #{tpu_custom_call.1} parent=1 // pred_check
      _
    $region3: #{tpu_custom_call.1} parent=1 // pred_check_branch
      %11 = sbr.rel (0) target = $region5
    $region4: #{tpu_custom_call.1} parent=1 // pred_region
      %s12 = sadd.s32 0, 0
      %p13 = scmp.lt.s32.totalorder %s12, 0
      %s14 = scalar_select %p13, %s12, 0
      %s15 = smul.u32 2, %s14
      %s17 = ssub.s32 256, 256
      %18 = vsyncadd [#allocation3], %s17
      %s19 = smul.addr %s15, 128
      %s20 = scalar_lea.hbm %s0, %s19
      %s21 = sshll.u32 [#allocation2], 4
      %s22 = int_to_ptr.vmem [resolvable:$true] %s21
      %27 = dma.hbm_to_vmem [thread:$0]  %s20, 256, %s22, [#allocation3], 128, 128, 8
    $region5: #{tpu_custom_call.1} parent=1 // pred_fallthru
      _
    // Predicated region
    $region6: #{tpu_custom_call.1} parent=1 // pred_check
      _
    $region7: #{tpu_custom_call.1} parent=1 // pred_check_branch
      %29 = sbr.rel (0) target = $region9
    $region8: #{tpu_custom_call.1} parent=1 // pred_region
      %s30 = sadd.s32 0, 0
      %p31 = scmp.lt.s32.totalorder %s30, 0
      %s32 = scalar_select %p31, %s30, 0
      %s33 = smul.u32 2, %s32
      %s35 = ssub.s32 256, 256
      %36 = vsyncadd [#allocation6], %s35
      %s37 = smul.addr %s33, 128
      %s38 = scalar_lea.hbm %s1, %s37
      %s39 = sshll.u32 [#allocation5], 4
      %s40 = int_to_ptr.vmem [resolvable:$true] %s39
      %45 = dma.hbm_to_vmem [thread:$0]  %s38, 256, %s40, [#allocation6], 128, 128, 8
    $region9: #{tpu_custom_call.1} parent=1 // pred_fallthru
      _
    // Predicated region
    $region10: #{tpu_custom_call.1} parent=1 // pred_check
      _
    $region11: #{tpu_custom_call.1} parent=1 // pred_check_branch
      %47 = sbr.rel (0) target = $region13
    $region12: #{tpu_custom_call.1} parent=1 // pred_region
      %48 = dma.done [#allocation3], 256
    $region13: #{tpu_custom_call.1} parent=1 // pred_fallthru
      _
    // Predicated region
    $region14: #{tpu_custom_call.1} parent=1 // pred_check
      _
    $region15: #{tpu_custom_call.1} parent=1 // pred_check_branch
      %50 = sbr.rel (0) target = $region17
    $region16: #{tpu_custom_call.1} parent=1 // pred_region
      %51 = dma.done [#allocation6], 256
    $region17: #{tpu_custom_call.1} parent=1 // pred_fallthru
      _
    %s52 = sadd.s32 0, 0
    %p53 = scmp.lt.s32.totalorder %s52, 0
    %s54 = scalar_select %p53, %s52, 0
    %s55 = smul.u32 2, %s54
    %s56 = sadd.s32 0, 0
    %p57 = scmp.lt.s32.totalorder %s56, 0
    %s58 = scalar_select %p57, %s56, 0
    %s59 = smul.u32 2, %s58
    %p60 = scmp.eq.s32.totalorder 0, 0
    // Predicated region
    $region18: #{tpu_custom_call.1} parent=1 // pred_check
      %p61 = pneg %p60
    $region19: #{tpu_custom_call.1} parent=1 // pred_check_branch
      %63 = sbr.rel (%p61) target = $region21
    $region20: #{tpu_custom_call.1} parent=1 // pred_region
      %64 = vst [vmem:[#allocation7] sm:$0xff] 0.0
    $region21: #{tpu_custom_call.1} parent=1 // pred_fallthru
      _
    %v65 = vld [vmem:[#allocation2] sm:$0xff]
    %v66 = vld [vmem:[#allocation2 + $0x8] sm:$0xff]
    %v67 = vld [vmem:[#allocation5] sm:$0xff]
    %v68 = vld [vmem:[#allocation5 + $0x8] sm:$0xff]
    %v69 = vmax.f32 %v65, 0.0
    %v70 = vmax.f32 %v66, 0.0
    %v71 = vmul.f32 %v65, %v67
    %v72 = vmul.f32 %v66, %v68
    %v73 = vsub.f32 %v69, %v71
    %v74 = vsub.f32 %v70, %v72
    %v75 = vand.u32 2147483647, %v65
    %v76 = vand.u32 2147483647, %v66
    %v77 = vsub.f32 0.0, %v75
    %v78 = vsub.f32 0.0, %v76
    %v79 = vmul.f32 %v77, 1.442695
    %v80 = vpow.pop %v79
    %v81 = vmul.f32 %v78, 1.442695
    %v82 = vpow.pop %v81
    %v83 = vadd.f32 %v80, 1.0
    %v84 = vlog2.pop %v83
    %v85 = vmul.f32 %v84, 0.6931472
    %v86 = vmul.f32 -0.5, %v80
    %v87 = vadd.f32 %v86, 1.0
    %v88 = vmul.f32 %v87, %v80
    %v89 = vand.u32 2147483647, %v80
    %vm90 = vcmp.lt.f32.partialorder %v89, 0.0004427343
    %v91 = vsel %vm90, %v88, %v85
    %v92 = vadd.f32 %v82, 1.0
    %v93 = vlog2.pop %v92
    %v94 = vmul.f32 %v93, 0.6931472
    %v95 = vmul.f32 -0.5, %v82
    %v96 = vadd.f32 %v95, 1.0
    %v97 = vmul.f32 %v96, %v82
    %v98 = vand.u32 2147483647, %v82
    %vm99 = vcmp.lt.f32.partialorder %v98, 0.0004427343
    %v100 = vsel %vm99, %v97, %v94
    %v101 = vadd.f32 %v73, %v91
    %v102 = vadd.f32 %v74, %v100
    %v103 = vsub.f32 0.0, %v101
    %v104 = vsub.f32 0.0, %v102
    %v105 = vmul.f32 %v103, 1.442695
    %v106 = vpow.pop %v105
    %v107 = vmul.f32 %v104, 1.442695
    %v108 = vpow.pop %v107
    %v109 = vsub.f32 1.0, %v106
    %v110 = vsub.f32 1.0, %v108
    %v111 = vmul.f32 %v109, %v109
    %v112 = vmul.f32 %v110, %v110
    %v113 = vmul.f32 %v111, 0.25
    %v114 = vmul.f32 %v112, 0.25
    %v115 = vmul.f32 %v113, %v101
    %v116 = vmul.f32 %v114, %v102
    %v117 = vld [vmem:[#allocation7] sm:$0xff]
    %v118 = vadd.f32 %v115, %v116
    %v119 = vadd.f32 %v117, %v118
    %120 = vst [vmem:[#allocation7] sm:$0xff] %v119
    // Predicated region
    $region22: #{tpu_custom_call.1} parent=1 // pred_check
      _
    $region23: #{tpu_custom_call.1} parent=1 // pred_check_branch
      %122 = sbr.rel (0) target = $region25
    $region24: #{tpu_custom_call.1} parent=1 // pred_region
      %s124 = ssub.s32 128, 128
      %125 = vsyncadd [#allocation4], %s124
      %s127 = sshll.u32 [#allocation7], 4
      %s128 = int_to_ptr.vmem [resolvable:$true] %s127
      %130 = dma.vmem_to_hbm [thread:$0]  %s128, 128, %s2, [#allocation4]
    $region25: #{tpu_custom_call.1} parent=1 // pred_fallthru
      _
    // Predicated region
    $region26: #{tpu_custom_call.1} parent=1 // pred_check
      _
    $region27: #{tpu_custom_call.1} parent=1 // pred_check_branch
      %132 = sbr.rel (0) target = $region29
    $region28: #{tpu_custom_call.1} parent=1 // pred_region
      %133 = dma.done [#allocation4], 128
    $region29: #{tpu_custom_call.1} parent=1 // pred_fallthru
      _
    %134 = vsyncpa [#allocation3], 1
    %135 = vsyncpa [#allocation6], 1
    %136 = vsyncpa [#allocation4], 1

</llo_original>
